<compile_context>
chip_gen: v5e
topology: v5e:2x2
jax: 0.10.0
libtpu: 0.0.40
codegen_flags: <defaults>
</compile_context>

<pallas_src>
import jax
import jax.numpy as jnp
from jax.experimental import pallas as pl
from jax.experimental.pallas import tpu as pltpu


def ncp_liquid_cell_kernel(ts_ref, x_ref, h_ref, wx_ref, wh_ref, b_ref, out_ref):
    """One batch tile of the cell update.

    pre = [g | h | f_g | f_h] = x @ Wx + hidden @ Wh + b   (mask already folded in)
    new_hidden = tanh(g) * (1 - sigma(f_g*ts + f_h)) + sigma(f_g*ts + f_h) * tanh(h)
    """
    ts = ts_ref[0]                                   # scalar timespan (SMEM)
    cdt = wx_ref.dtype                               # compute dtype of the MXU inputs
    x = x_ref[...].astype(cdt)                       # (tb, in_features)
    h = h_ref[...].astype(cdt)                       # (tb, n_hidden)

    # Single fused, lane-dense (N = 4*n_hidden) pre-activation; f32 accumulation.
    pre = (jnp.dot(x, wx_ref[...], preferred_element_type=jnp.float32)
           + jnp.dot(h, wh_ref[...], preferred_element_type=jnp.float32)
           + b_ref[...])                             # (tb, 4*n_hidden), f32

    n = out_ref.shape[-1]                            # n_hidden
    g_out = pre[:, 0 * n:1 * n]
    h_out = pre[:, 1 * n:2 * n]
    fh_g = pre[:, 2 * n:3 * n]
    fh_h = pre[:, 3 * n:4 * n]

    gate = jax.nn.sigmoid(fh_g * ts + fh_h)          # sigma(f_g*ts + f_h)  (EUP)
    new_h = jnp.tanh(g_out) * (1.0 - gate) + gate * jnp.tanh(h_out)
    out_ref[...] = new_h.astype(out_ref.dtype)


def prep_mask(raw_mask):
    """Mirror of NCPLiquidCell._prep_mask.

    raw_mask: (in_features, n_hidden) with entries in {-1, 0, 1}
    returns : (n_hidden, head_size) = abs(concat([raw_mask, ones]).T)   (PyTorch layout)
    """
    n_extras = raw_mask.shape[1]
    extra_nodes = jnp.ones((n_extras, n_extras), raw_mask.dtype)
    full = jnp.concatenate([raw_mask, extra_nodes], axis=0)   # (head_size, n_hidden)
    return jnp.abs(full.T)                                    # (n_hidden, head_size)


def init_params(key, in_features, n_hidden):
    """Deterministic synthetic parameters in PyTorch layout:
    nn.Linear weights are (n_hidden, head_size), biases (n_hidden,)."""
    head_size = in_features + n_hidden
    bound = 1.0 / (float(head_size) ** 0.5)
    keys = jax.random.split(key, 9)

    def linear(kw, kb):
        w = jax.random.uniform(kw, (n_hidden, head_size), jnp.float32, -bound, bound)
        b = jax.random.uniform(kb, (n_hidden,), jnp.float32, -bound, bound)
        return w, b

    g_w, g_b = linear(keys[0], keys[1])
    h_w, h_b = linear(keys[2], keys[3])
    fg_w, fg_b = linear(keys[4], keys[5])
    fh_w, fh_b = linear(keys[6], keys[7])

    raw_mask = jax.random.choice(
        keys[8], jnp.array([-1.0, 0.0, 1.0], jnp.float32), (in_features, n_hidden))

    return {"g_w": g_w, "g_b": g_b, "h_w": h_w, "h_b": h_b,
            "fg_w": fg_w, "fg_b": fg_b, "fh_w": fh_w, "fh_b": fh_b,
            "sparsity_mask": prep_mask(raw_mask)}


def pack_params(params, in_features, n_hidden, weight_dtype=jnp.float32):
    """One-time parameter prep for the kernel:
      * fold the sparsity mask into the g/h weights (removes per-call VPU multiplies
        and the mask DMA entirely),
      * fuse the four heads along N into one (head_size, 4*n_hidden) slab,
      * split the slab into an x part and a hidden part (no cat([x, hidden]) needed),
      * optionally cast weights to bf16 for the v6e/v7x MXU (f32 accumulation kept).
    """
    m = params["sparsity_mask"]                                   # (n_hidden, head_size)
    heads_w = [params["g_w"] * m, params["h_w"] * m, params["fg_w"], params["fh_w"]]
    heads_b = [params["g_b"], params["h_b"], params["fg_b"], params["fh_b"]]

    w_all = jnp.concatenate([w.T for w in heads_w], axis=1)       # (head_size, 4*n_hidden)
    b_all = jnp.concatenate(heads_b)[None, :]                     # (1, 4*n_hidden)

    return {"wx": w_all[:in_features].astype(weight_dtype),       # (in_features, 4*n_hidden)
            "wh": w_all[in_features:].astype(weight_dtype),       # (n_hidden,    4*n_hidden)
            "b": b_all.astype(jnp.float32)}


def ncp_liquid_cell_forward(x, hidden, ts, packed, *, batch_tile=512):
    """JAX glue around the Pallas kernel (single timestep)."""
    B, in_features = x.shape
    n_hidden = hidden.shape[1]
    wx, wh, b = packed["wx"], packed["wh"], packed["b"]
    assert wx.shape == (in_features, 4 * n_hidden)
    assert wh.shape == (n_hidden, 4 * n_hidden)

    # Batch tiling: single full block for small B, 512-row tiles (multiple of 8) otherwise.
    tb = B if B <= batch_tile else batch_tile
    pad = (-B) % tb
    if pad:
        x = jnp.pad(x, ((0, pad), (0, 0)))
        hidden = jnp.pad(hidden, ((0, pad), (0, 0)))
    Bp = B + pad

    ts_arr = jnp.asarray([ts], dtype=jnp.float32)

    out = pl.pallas_call(
        ncp_liquid_cell_kernel,
        out_shape=jax.ShapeDtypeStruct((Bp, n_hidden), jnp.float32),
        grid=(Bp // tb,),
        in_specs=[
            pl.BlockSpec(memory_space=pltpu.MemorySpace.SMEM),            # ts (scalar)
            pl.BlockSpec((tb, in_features), lambda i: (i, 0)),            # x tile
            pl.BlockSpec((tb, n_hidden), lambda i: (i, 0)),               # hidden tile
            pl.BlockSpec((in_features, 4 * n_hidden), lambda i: (0, 0)),  # Wx (resident)
            pl.BlockSpec((n_hidden, 4 * n_hidden), lambda i: (0, 0)),     # Wh (resident)
            pl.BlockSpec((1, 4 * n_hidden), lambda i: (0, 0)),            # bias (resident)
        ],
        out_specs=pl.BlockSpec((tb, n_hidden), lambda i: (i, 0)),
        compiler_params=pltpu.CompilerParams(
            dimension_semantics=("parallel",)),                           # megacore on v7x
    )(ts_arr, x, hidden, wx, wh, b)

    return out[:B] if pad else out


def reference_forward(x, hidden, ts, params):
    """Pure-JAX reference reproducing the PyTorch module exactly (unfused, f32)."""
    xc = jnp.concatenate([x, hidden], axis=1)
    m = params["sparsity_mask"]
    g_out = xc @ (params["g_w"] * m).T + params["g_b"]
    h_out = xc @ (params["h_w"] * m).T + params["h_b"]
    fh_g = xc @ params["fg_w"].T + params["fg_b"]
    fh_h = xc @ params["fh_w"].T + params["fh_b"]
    gate = jax.nn.sigmoid(fh_g * ts + fh_h)
    return jnp.tanh(g_out) * (1.0 - gate) + gate * jnp.tanh(h_out)


if __name__ == "__main__":
    B, in_features, n_hidden = 2, 4, 32
    ts = 0.5

    key = jax.random.PRNGKey(0)
    k_params, k_x, k_h = jax.random.split(key, 3)

    params = init_params(k_params, in_features, n_hidden)
    x = jax.random.normal(k_x, (B, in_features), jnp.float32)
    hidden = jax.random.normal(k_h, (B, n_hidden), jnp.float32)

    ref = reference_forward(x, hidden, ts, params)

    # f32-weight path (faithful to the PyTorch module; preferred on v5e).
    packed_f32 = pack_params(params, in_features, n_hidden, jnp.float32)
    out = jax.block_until_ready(ncp_liquid_cell_forward(x, hidden, ts, packed_f32))
    assert out.shape == (B, n_hidden)
    assert jnp.allclose(out, ref, atol=1e-4, rtol=1e-4)

    # bf16-weight path (preferred on v6e/v7x MXU); f32 accumulation + f32 gating math.
    packed_bf16 = pack_params(params, in_features, n_hidden, jnp.bfloat16)
    out_bf16 = jax.block_until_ready(ncp_liquid_cell_forward(x, hidden, ts, packed_bf16))
    assert out_bf16.shape == (B, n_hidden)
    assert jnp.allclose(out_bf16, ref, atol=5e-2, rtol=5e-2)

    print("KERNEL_OK")
</pallas_src>

<mosaic_0001>
module attributes {stable_mosaic.version = 11 : i64} {
  func.func @ncp_liquid_cell_kernel(%arg0: i32, %arg1: memref<1xf32, #tpu.memory_space<smem>>, %arg2: memref<2x4xf32, #tpu.memory_space<vmem>>, %arg3: memref<2x32xf32, #tpu.memory_space<vmem>>, %arg4: memref<4x128xf32, #tpu.memory_space<vmem>>, %arg5: memref<32x128xf32, #tpu.memory_space<vmem>>, %arg6: memref<1x128xf32, #tpu.memory_space<vmem>>, %arg7: memref<2x32xf32, #tpu.memory_space<vmem>>) attributes {dimension_semantics = [#tpu.dimension_semantics<parallel>], iteration_bounds = array<i64: 1>, scalar_prefetch = 0 : i64, scratch_operands = 0 : i64, tpu.core_type = #tpu.core_type<tc>, window_params = [{transform_indices = @transform_0, window_bounds = array<i64: 1>}, {transform_indices = @transform_1, window_bounds = array<i64: 2, 4>}, {transform_indices = @transform_2, window_bounds = array<i64: 2, 32>}, {pipeline_mode = #tpu.pipeline_mode<synchronous>, transform_indices = @transform_3, window_bounds = array<i64: 4, 128>}, {pipeline_mode = #tpu.pipeline_mode<synchronous>, transform_indices = @transform_4, window_bounds = array<i64: 32, 128>}, {pipeline_mode = #tpu.pipeline_mode<synchronous>, transform_indices = @transform_5, window_bounds = array<i64: 1, 128>}, {transform_indices = @transform_6, window_bounds = array<i64: 2, 32>}]} {
    %c0 = arith.constant 0 : index
    %0 = memref.load %arg1[%c0] : memref<1xf32, #tpu.memory_space<smem>>
    %c0_0 = arith.constant 0 : index
    %c0_1 = arith.constant 0 : index
    %1 = vector.load %arg2[%c0_0, %c0_1] : memref<2x4xf32, #tpu.memory_space<vmem>>, vector<2x4xf32>
    %c0_2 = arith.constant 0 : index
    %c0_3 = arith.constant 0 : index
    %2 = vector.load %arg3[%c0_2, %c0_3] : memref<2x32xf32, #tpu.memory_space<vmem>>, vector<2x32xf32>
    %c0_4 = arith.constant 0 : index
    %c0_5 = arith.constant 0 : index
    %3 = vector.load %arg4[%c0_4, %c0_5] : memref<4x128xf32, #tpu.memory_space<vmem>>, vector<4x128xf32>
    %cst = arith.constant dense<0.000000e+00> : vector<2x128xf32>
    %4 = tpu.matmul %1, %3, %cst {dimension_numbers = #tpu.dot_dimension_numbers<[1], [0], [0], [1], [0, 0, 1, 1], [], []>} : vector<2x4xf32>, vector<4x128xf32>, vector<2x128xf32> -> vector<2x128xf32>
    %c0_6 = arith.constant 0 : index
    %c0_7 = arith.constant 0 : index
    %5 = vector.load %arg5[%c0_6, %c0_7] : memref<32x128xf32, #tpu.memory_space<vmem>>, vector<32x128xf32>
    %cst_8 = arith.constant dense<0.000000e+00> : vector<2x128xf32>
    %6 = tpu.matmul %2, %5, %cst_8 {dimension_numbers = #tpu.dot_dimension_numbers<[1], [0], [0], [1], [0, 0, 1, 1], [], []>} : vector<2x32xf32>, vector<32x128xf32>, vector<2x128xf32> -> vector<2x128xf32>
    %7 = arith.addf %4, %6 : vector<2x128xf32>
    %c0_9 = arith.constant 0 : index
    %c0_10 = arith.constant 0 : index
    %8 = vector.load %arg6[%c0_9, %c0_10] : memref<1x128xf32, #tpu.memory_space<vmem>>, vector<1x128xf32>
    %9 = vector.broadcast %8 : vector<1x128xf32> to vector<2x128xf32>
    %10 = arith.addf %7, %9 : vector<2x128xf32>
    %11 = vector.extract_strided_slice %10 {offsets = [0, 0], sizes = [2, 32], strides = [1, 1]} : vector<2x128xf32> to vector<2x32xf32>
    %12 = vector.extract_strided_slice %10 {offsets = [0, 32], sizes = [2, 32], strides = [1, 1]} : vector<2x128xf32> to vector<2x32xf32>
    %13 = vector.extract_strided_slice %10 {offsets = [0, 64], sizes = [2, 32], strides = [1, 1]} : vector<2x128xf32> to vector<2x32xf32>
    %14 = vector.extract_strided_slice %10 {offsets = [0, 96], sizes = [2, 32], strides = [1, 1]} : vector<2x128xf32> to vector<2x32xf32>
    %15 = vector.broadcast %0 : f32 to vector<2x32xf32>
    %16 = arith.mulf %13, %15 : vector<2x32xf32>
    %17 = arith.addf %16, %14 : vector<2x32xf32>
    %18 = arith.negf %17 : vector<2x32xf32>
    %19 = math.exp %18 : vector<2x32xf32>
    %cst_11 = arith.constant 1.000000e+00 : f32
    %20 = vector.broadcast %cst_11 : f32 to vector<2x32xf32>
    %21 = arith.addf %20, %19 : vector<2x32xf32>
    %22 = arith.divf %20, %21 : vector<2x32xf32>
    %23 = math.tanh %11 : vector<2x32xf32>
    %cst_12 = arith.constant 1.000000e+00 : f32
    %24 = vector.broadcast %cst_12 : f32 to vector<2x32xf32>
    %25 = arith.subf %24, %22 : vector<2x32xf32>
    %26 = arith.mulf %23, %25 : vector<2x32xf32>
    %27 = math.tanh %12 : vector<2x32xf32>
    %28 = arith.mulf %22, %27 : vector<2x32xf32>
    %29 = arith.addf %26, %28 : vector<2x32xf32>
    %c0_13 = arith.constant 0 : index
    %c0_14 = arith.constant 0 : index
    %30 = vector.load %arg7[%c0_13, %c0_14] : memref<2x32xf32, #tpu.memory_space<vmem>>, vector<2x32xf32>
    tpu.vector_store %arg7[%c0_13, %c0_14], %29 {strides = array<i32>} : memref<2x32xf32, #tpu.memory_space<vmem>>, vector<2x32xf32>,
    return
  }
  func.func @transform_0(%arg0: i32) -> i32 {
    %c0_i32 = arith.constant 0 : i32
    %c0_i32_0 = arith.constant 0 : i32
    return %c0_i32 : i32
  }
  func.func @transform_1(%arg0: i32) -> (i32, i32) {
    %c0_i32 = arith.constant 0 : i32
    %c0_i32_0 = arith.constant 0 : i32
    return %arg0, %c0_i32 : i32, i32
  }
  func.func @transform_2(%arg0: i32) -> (i32, i32) {
    %c0_i32 = arith.constant 0 : i32
    %c0_i32_0 = arith.constant 0 : i32
    return %arg0, %c0_i32 : i32, i32
  }
  func.func @transform_3(%arg0: i32) -> (i32, i32) {
    %c0_i32 = arith.constant 0 : i32
    %c0_i32_0 = arith.constant 0 : i32
    %c0_i32_1 = arith.constant 0 : i32
    return %c0_i32, %c0_i32_0 : i32, i32
  }
  func.func @transform_4(%arg0: i32) -> (i32, i32) {
    %c0_i32 = arith.constant 0 : i32
    %c0_i32_0 = arith.constant 0 : i32
    %c0_i32_1 = arith.constant 0 : i32
    return %c0_i32, %c0_i32_0 : i32, i32
  }
  func.func @transform_5(%arg0: i32) -> (i32, i32) {
    %c0_i32 = arith.constant 0 : i32
    %c0_i32_0 = arith.constant 0 : i32
    %c0_i32_1 = arith.constant 0 : i32
    return %c0_i32, %c0_i32_0 : i32, i32
  }
  func.func @transform_6(%arg0: i32) -> (i32, i32) {
    %c0_i32 = arith.constant 0 : i32
    %c0_i32_0 = arith.constant 0 : i32
    return %arg0, %c0_i32 : i32, i32
  }
}

</mosaic_0001>

<llo_original>
// kernel: tpu_custom_call.1
$region0: #{tpu_custom_call.1}
  #allocation0 [shape = 'u32[]', space=smem, size = 0x4, offset = 0x4, fixed_abs, tag = 'smem constant byte address 0x4 - core index']
  #allocation1 [shape = 'u32[72,128]{1,0:T(1,128)}', space=vmem, size = 0x9000, scoped, tag = 'internal scratch']
  #allocation2 [shape = 'f32[1]{0:T(128)S(6)}', space=smem, size = 0x200, scoped, tag = 'scoped memory for tpu_custom_call.1']
  %s0 = inlined_call_operand.<no memory space> [shape: f32[1], index: 0, kind: input, shape index: {}]
  %s1 = inlined_call_operand.vmem [shape: f32[2,4], index: 1, kind: input, shape index: {}]
  %s2 = inlined_call_operand.hbm [shape: f32[2,32], index: 2, kind: input, shape index: {}]
  %s3 = inlined_call_operand.hbm [shape: f32[4,128], index: 3, kind: input, shape index: {}]
  %s4 = inlined_call_operand.hbm [shape: f32[32,128], index: 4, kind: input, shape index: {}]
  %s5 = inlined_call_operand.vmem [shape: f32[1,128], index: 5, kind: input, shape index: {}]
  %s6 = inlined_call_operand.hbm [shape: f32[2,32], index: 6, kind: output, shape index: {}]
  %s7 = sld [smem:[#allocation0]]
  $region46: #{tpu_custom_call.1} parent=0
    _
  %s9 = ssub.s32 1, %s7
  %s10 = scalar_select 0, %s9, %s7
  %11 = sst [smem:[#allocation2]] %s0
  $region1: #{tpu_custom_call.1} parent=0
    #allocation3 [shape = 'u8[1024]{0}', space=vmem, size = 0x400, scoped, tag = 'input window, operand 2, single buffered']
    #allocation4 [shape = 's32[1]{0}', space=sflag, size = 0x4, scoped, tag = 'scoped memory for tpu_custom_call.1']
    #allocation5 [shape = 's32[1]{0}', space=sflag, size = 0x4, scoped, tag = 'scoped memory for tpu_custom_call.1']
    #allocation6 [shape = 'u8[2048]{0}', space=vmem, size = 0x800, scoped, tag = 'input window, operand 3, single buffered']
    #allocation7 [shape = 's32[1]{0}', space=sflag, size = 0x4, scoped, tag = 'scoped memory for tpu_custom_call.1']
    #allocation8 [shape = 'u8[16384]{0}', space=vmem, size = 0x4000, scoped, tag = 'input window, operand 4, single buffered']
    #allocation9 [shape = 'u8[1024]{0}', space=vmem, size = 0x400, scoped, tag = 'output window, operand 0, single buffered']
    %12 = vsyncpa [#allocation4], 0
    %13 = vsyncpa [#allocation7], 0
    %14 = vsyncpa [#allocation5], 0
    // Predicated region
    $region2: #{tpu_custom_call.1} parent=1 // pred_check
      _
    $region3: #{tpu_custom_call.1} parent=1 // pred_check_branch
      %16 = sbr.rel (0) target = $region5
    $region4: #{tpu_custom_call.1} parent=1 // pred_region
      _
    $region5: #{tpu_custom_call.1} parent=1 // pred_fallthru
      _
    // Predicated region
    $region6: #{tpu_custom_call.1} parent=1 // pred_check
      _
    $region7: #{tpu_custom_call.1} parent=1 // pred_check_branch
      %18 = sbr.rel (0) target = $region9
    $region8: #{tpu_custom_call.1} parent=1 // pred_region
      _
    $region9: #{tpu_custom_call.1} parent=1 // pred_fallthru
      _
    // Predicated region
    $region10: #{tpu_custom_call.1} parent=1 // pred_check
      _
    $region11: #{tpu_custom_call.1} parent=1 // pred_check_branch
      %20 = sbr.rel (0) target = $region13
    $region12: #{tpu_custom_call.1} parent=1 // pred_region
      %22 = vsyncadd [#allocation4], 0
      %s24 = sshll.u32 %s2, 4
      %s25 = int_to_ptr.hbm [resolvable:$true] %s24
      %s26 = sshll.u32 [#allocation3], 4
      %s27 = int_to_ptr.vmem [resolvable:$true] %s26
      %29 = dma.hbm_to_vmem [thread:$0]  %s25, 32, %s27, [#allocation4]
    $region13: #{tpu_custom_call.1} parent=1 // pred_fallthru
      _
    // Predicated region
    $region14: #{tpu_custom_call.1} parent=1 // pred_check
      _
    $region15: #{tpu_custom_call.1} parent=1 // pred_check_branch
      %31 = sbr.rel (0) target = $region17
    $region16: #{tpu_custom_call.1} parent=1 // pred_region
      %33 = vsyncadd [#allocation7], 0
      %s35 = sshll.u32 %s3, 4
      %s36 = int_to_ptr.hbm [resolvable:$true] %s35
      %s37 = sshll.u32 [#allocation6], 4
      %s38 = int_to_ptr.vmem [resolvable:$true] %s37
      %40 = dma.hbm_to_vmem [thread:$0]  %s36, 64, %s38, [#allocation7]
    $region17: #{tpu_custom_call.1} parent=1 // pred_fallthru
      _
    // Predicated region
    $region18: #{tpu_custom_call.1} parent=1 // pred_check
      _
    $region19: #{tpu_custom_call.1} parent=1 // pred_check_branch
      %42 = sbr.rel (0) target = $region21
    $region20: #{tpu_custom_call.1} parent=1 // pred_region
      %44 = vsyncadd [#allocation7], 0
      %s45 = sshll.u32 %s4, 4
      %s46 = int_to_ptr.hbm [resolvable:$true] %s45
      %s47 = sshll.u32 [#allocation8], 4
      %s48 = int_to_ptr.vmem [resolvable:$true] %s47
      %53 = dma.hbm_to_vmem [thread:$0]  %s46, 512, %s48, [#allocation7], 128, 128, 8
    $region21: #{tpu_custom_call.1} parent=1 // pred_fallthru
      _
    // Predicated region
    $region22: #{tpu_custom_call.1} parent=1 // pred_check
      _
    $region23: #{tpu_custom_call.1} parent=1 // pred_check_branch
      %55 = sbr.rel (0) target = $region25
    $region24: #{tpu_custom_call.1} parent=1 // pred_region
      _
    $region25: #{tpu_custom_call.1} parent=1 // pred_fallthru
      _
    // Predicated region
    $region26: #{tpu_custom_call.1} parent=1 // pred_check
      _
    $region27: #{tpu_custom_call.1} parent=1 // pred_check_branch
      %57 = sbr.rel (0) target = $region29
    $region28: #{tpu_custom_call.1} parent=1 // pred_region
      %59 = dma.done [#allocation4], 32
    $region29: #{tpu_custom_call.1} parent=1 // pred_fallthru
      _
    // Predicated region
    $region30: #{tpu_custom_call.1} parent=1 // pred_check
      _
    $region31: #{tpu_custom_call.1} parent=1 // pred_check_branch
      %61 = sbr.rel (0) target = $region33
    $region32: #{tpu_custom_call.1} parent=1 // pred_region
      %63 = dma.done [#allocation7], 64
    $region33: #{tpu_custom_call.1} parent=1 // pred_fallthru
      _
    // Predicated region
    $region34: #{tpu_custom_call.1} parent=1 // pred_check
      _
    $region35: #{tpu_custom_call.1} parent=1 // pred_check_branch
      %65 = sbr.rel (0) target = $region37
    $region36: #{tpu_custom_call.1} parent=1 // pred_region
      %67 = dma.done [#allocation7], 512
    $region37: #{tpu_custom_call.1} parent=1 // pred_fallthru
      _
    %s68 = sld [smem:[#allocation2]]
    %v69 = vld [vmem:[%s1] sm:$0x3]
    %v70 = vld [vmem:[#allocation3] sm:$0x3]
    %v71 = vld [vmem:[#allocation6] sm:$0xf]
    %v72 = vld [vmem:[#allocation8] sm:$0xff]
    %v73 = vld [vmem:[#allocation8 + $0x8] sm:$0xff]
    %v74 = vld [vmem:[#allocation8 + $0x10] sm:$0xff]
    %v75 = vld [vmem:[#allocation8 + $0x18] sm:$0xff]
    %vm76 = vcmask 261120
    %v78 = vsel %vm76, %v70, 0
    %80 = vmatpush.msra.mxu0 0.0
    %81 = vmatpush.msra.mxu0 0.0
    %82 = vmatpush.msra.mxu0 0.0
    %83 = vmatpush.msra.mxu0 0.0
    %84 = vmatpush.msra.mxu0 0.0
    %85 = vmatpush.msra.mxu0 0.0
    %86 = vmatpush.msra.mxu0 0.0
    %87 = vmatpush.msra.mxu0 0.0
    %88 = vmatpush.msra.mxu0 0.0
    %89 = vmatpush.msra.mxu0 0.0
    %90 = vmatpush.msra.mxu0 0.0
    %91 = vmatpush.msra.mxu0 0.0
    %92 = vmatpush.msra.mxu0 %v75
    %93 = vmatpush.msra.mxu0 %v74
    %94 = vmatpush.msra.mxu0 %v73
    %95 = vmatpush.msra.mxu0 %v72
    %96 = vmatmul.f32.gmra.mxu0 %v78
    %v97 = vpop.f32.mrf.mxu0
    %v98 = vadd.f32 0.0, %v97
    %99 = vdwg.mxu0
    %vm100 = vcmask 31744
    %v102 = vsel %vm100, %v69, 0
    %vm104 = vcmask 1043456
    %v106 = vsel %vm104, %v71, 0
    %108 = vmatpush.msra.mxu0 0.0
    %109 = vmatpush.msra.mxu0 0.0
    %110 = vmatpush.msra.mxu0 0.0
    %111 = vmatpush.msra.mxu0 0.0
    %112 = vmatpush.msra.mxu0 0.0
    %113 = vmatpush.msra.mxu0 0.0
    %114 = vmatpush.msra.mxu0 0.0
    %115 = vmatpush.msra.mxu0 0.0
    %116 = vmatpush.msra.mxu0 0.0
    %117 = vmatpush.msra.mxu0 0.0
    %118 = vmatpush.msra.mxu0 0.0
    %119 = vmatpush.msra.mxu0 0.0
    %120 = vmatpush.msra.mxu0 0.0
    %121 = vmatpush.msra.mxu0 0.0
    %122 = vmatpush.msra.mxu0 0.0
    %123 = vmatpush.msra.mxu0 %v106
    %124 = vmatmul.f32.gmra.mxu0 %v102
    %v125 = vpop.f32.mrf.mxu0
    %v126 = vadd.f32 %v98, %v125
    %127 = vdwg.mxu0
    %v128 = vld [vmem:[%s5] sm:$0x1]
    %v130 = vperm.slane %v128, 0
    %v132 = vadd.f32 %v126, %v130
    %v133 = vstv %s68
    %v134 = vmul.f32 %v132, %v133
    %136 = vrot.lane.b32.xlu0 %v132, 96
    %v137 = vpop.permute.xlu0 %136
    %v139 = vadd.f32 %v134, %v137
    %v140 = vxor.u32 %v139, 2147483648
    %v141 = vmul.f32 %v140, 1.442695
    %v142 = vpow.pop %v141
    %v143 = vadd.f32 %v142, 1.0
    %v144 = vrcp.pop %v143
    %v145 = vmul.f32 %v143, %v144
    %v146 = vsub.f32 1.0, %v145
    %v147 = vmul.f32 %v144, %v146
    %v148 = vadd.f32 %v144, %v147
    %vm149 = vweird.f32 %v143
    %vm150 = vweird.f32 %v144
    %vm151 = vmor %vm149, %vm150
    %v152 = vsel %vm151, %v144, %v148
    %v153 = vand.u32 2147483647, %v143
    %vm154 = vcmp.eq.f32.partialorder %v153, 8.507059e+37
    %v155 = vand.u32 %v143, 2147483648
    %v156 = vor.u32 1.1754944e-38, %v155
    %v157 = vsel %vm154, %v156, %v152
    %v158 = vmul.f32 1.0, %v157
    %v159 = vtanh.pop %v132
    %v160 = vsub.f32 1.0, %v158
    %162 = vrot.lane.b32.xlu0 %v160, 64
    %v163 = vpop.permute.xlu0 %162
    %v165 = vmul.f32 %v159, %v163
    %167 = vrot.lane.b32.xlu0 %v159, 32
    %v168 = vpop.permute.xlu0 %167
    %v170 = vmul.f32 %v158, %v168
    %172 = vrot.lane.b32.xlu0 %v170, 64
    %v173 = vpop.permute.xlu0 %172
    %v175 = vadd.f32 %v165, %v173
    %vm176 = vcmask 254976
    %177 = vst.msk [vmem:[#allocation9] sm:$0x3] %vm176, %v175
    // Predicated region
    $region38: #{tpu_custom_call.1} parent=1 // pred_check
      _
    $region39: #{tpu_custom_call.1} parent=1 // pred_check_branch
      %179 = sbr.rel (0) target = $region41
    $region40: #{tpu_custom_call.1} parent=1 // pred_region
      %181 = vsyncadd [#allocation5], 0
      %s183 = sshll.u32 [#allocation9], 4
      %s184 = int_to_ptr.vmem [resolvable:$true] %s183
      %s185 = sshll.u32 %s6, 4
      %s186 = int_to_ptr.hbm [resolvable:$true] %s185
      %188 = dma.vmem_to_hbm [thread:$0]  %s184, 32, %s186, [#allocation5]
    $region41: #{tpu_custom_call.1} parent=1 // pred_fallthru
      _
    // Predicated region
    $region42: #{tpu_custom_call.1} parent=1 // pred_check
      _
    $region43: #{tpu_custom_call.1} parent=1 // pred_check_branch
      %190 = sbr.rel (0) target = $region45
    $region44: #{tpu_custom_call.1} parent=1 // pred_region
      %192 = dma.done [#allocation5], 32
    $region45: #{tpu_custom_call.1} parent=1 // pred_fallthru
      _
    %193 = vsyncpa [#allocation4], 1
    %194 = vsyncpa [#allocation7], 1
    %195 = vsyncpa [#allocation5], 1

</llo_original>
